<compile_context>
chip_gen: v6e
topology: v6e:2x2x1
jax: 0.10.0
libtpu: 0.0.40
codegen_flags: <defaults>
</compile_context>

<pallas_src>
import math
import functools

import jax
import jax.numpy as jnp
from jax.experimental import pallas as pl
from jax.experimental.pallas import tpu as pltpu


def _rmsnorm_kernel(x_ref, scale_ref, o_ref, *, eps, dim):
    # x_ref: (TR, D), scale_ref: (1, D), o_ref: (TR, D)
    x = x_ref[...].astype(jnp.float32)
    # L2 norm over the last dim (per-row; OOB rows of a partial block are
    # garbage but independent and never written back to HBM).
    sumsq = jnp.sum(x * x, axis=-1, keepdims=True)            # (TR, 1)
    norm = jnp.sqrt(sumsq)
    # denom = norm / sqrt(dim) + eps
    denom = norm * jnp.float32(1.0 / math.sqrt(dim)) + jnp.float32(eps)
    # Per-row reciprocal ((TR,1), cheap) then broadcast multiply instead of a
    # per-element divide. approx=False keeps numerics within 1e-5 of reference.
    inv = pl.reciprocal(denom, approx=False)                   # (TR, 1)
    y = (x * inv) * scale_ref[...].astype(jnp.float32)
    o_ref[...] = y.astype(o_ref.dtype)


def _round_up(a, b):
    return ((a + b - 1) // b) * b


def _vmem_limit_bytes():
    """Scoped VMEM limit: ~3/4 of physical per-core VMEM, capped at 96 MiB.

    v7x (64 MiB/core) -> 48 MiB; v5e/v6e (128 MiB) -> 96 MiB.  Conservative
    48 MiB fallback if the trace-time hardware query is unavailable.
    """
    try:
        cap = int(pltpu.get_tpu_info().vmem_capacity_bytes)
        return min(cap * 3 // 4, 96 * 1024 * 1024)
    except Exception:
        return 48 * 1024 * 1024


def _choose_tile_rows(rows, D, itemsize, vmem_limit):
    """Bytes-based row tile: ~8 MiB I/O tiles, VMEM-budgeted incl. f32 temps."""
    # Dtype-aware sublane multiple.  (int8/fp8 inputs are not supported: the
    # final cast back to the input dtype would be a lossy truncation.)
    sub = 8 if itemsize >= 4 else 16
    if rows <= sub:
        return rows                      # single full-extent block (== array dim)

    io_row = D * itemsize                # bytes/row per tensor per buffer
    # Per-step VMEM footprint per row:
    #   double-buffered input (2x) + double-buffered output (2x)  -> 4 * io_row
    #   f32 intermediates (x upcast + y), not covered by I/O bufs -> 8 * D
    vmem_row = 4 * io_row + 8 * D
    budget = max(vmem_limit - 8 * 1024 * 1024, 4 * 1024 * 1024)  # headroom

    tr_vmem = budget // vmem_row
    tr_io = (8 * 1024 * 1024) // io_row          # keep one I/O tile <= ~8 MiB
    tr = max(sub, min(tr_vmem, tr_io))
    tr = (tr // sub) * sub
    tr = min(tr, _round_up(rows, sub))

    # Prefer >= 8 blocks (>= 4 per v7x TensorCore) when tiles stay >= ~1 MiB.
    tr_8 = _round_up(-(-rows // 8), sub)
    if tr_8 * io_row >= (1 << 20):
        tr = min(tr, tr_8)
    return max(tr, sub)


def mini_rms_norm(x, scale, eps=1e-8):
    """x: (..., D), scale: (D,). Returns same shape/dtype as x."""
    orig_shape = x.shape
    D = orig_shape[-1]
    rows = 1
    for s in orig_shape[:-1]:
        rows *= s

    itemsize = jnp.dtype(x.dtype).itemsize
    vmem_limit = _vmem_limit_bytes()
    tr = _choose_tile_rows(rows, D, itemsize, vmem_limit)

    x2d = x.reshape(rows, D)
    scale2d = scale.reshape(1, D)

    grid = (pl.cdiv(rows, tr),)
    kernel = functools.partial(_rmsnorm_kernel, eps=eps, dim=D)

    out = pl.pallas_call(
        kernel,
        out_shape=jax.ShapeDtypeStruct((rows, D), x.dtype),
        grid_spec=pltpu.PrefetchScalarGridSpec(
            num_scalar_prefetch=0,
            grid=grid,
            in_specs=[
                pl.BlockSpec((tr, D), lambda i: (i, 0)),     # x row tile
                pl.BlockSpec((1, D), lambda i: (0, 0)),      # scale (resident)
            ],
            out_specs=pl.BlockSpec((tr, D), lambda i: (i, 0)),
        ),
        compiler_params=pltpu.CompilerParams(
            dimension_semantics=("parallel",),
            vmem_limit_bytes=vmem_limit,
        ),
    )(x2d, scale2d)

    return out.reshape(orig_shape)


def _reference(x, scale, eps=1e-8):
    xf = x.astype(jnp.float32)
    norm = jnp.sqrt(jnp.sum(xf * xf, axis=-1, keepdims=True))
    d = x.shape[-1]
    return (xf / (norm / math.sqrt(d) + eps)
            * scale.astype(jnp.float32)).astype(x.dtype)


if __name__ == "__main__":
    key = jax.random.PRNGKey(0)
    batch, seq, hidden = 2, 8, 32
    x = jax.random.normal(key, (batch, seq, hidden), dtype=jnp.float32)
    # Deterministic parameter init: scale = ones(dim), same as nn.Parameter(torch.ones(dim))
    scale = jnp.ones((hidden,), dtype=jnp.float32)

    y = mini_rms_norm(x, scale, eps=1e-8)
    jax.block_until_ready(y)

    y_ref = _reference(x, scale, eps=1e-8)
    assert y.shape == x.shape and y.dtype == x.dtype
    assert jnp.allclose(y, y_ref, atol=1e-5, rtol=1e-5)

    print("KERNEL_OK")
</pallas_src>

<mosaic_0001>
module attributes {stable_mosaic.version = 11 : i64} {
  func.func @_rmsnorm_kernel(%arg0: i32, %arg1: memref<16x32xf32, #tpu.memory_space<vmem>>, %arg2: memref<1x32xf32, #tpu.memory_space<vmem>>, %arg3: memref<16x32xf32, #tpu.memory_space<vmem>>) attributes {dimension_semantics = [#tpu.dimension_semantics<parallel>], iteration_bounds = array<i64: 1>, scalar_prefetch = 0 : i64, scratch_operands = 0 : i64, tpu.core_type = #tpu.core_type<tc>, window_params = [{transform_indices = @transform_0, window_bounds = array<i64: 16, 32>}, {pipeline_mode = #tpu.pipeline_mode<synchronous>, transform_indices = @transform_1, window_bounds = array<i64: 1, 32>}, {transform_indices = @transform_2, window_bounds = array<i64: 16, 32>}]} {
    %c0 = arith.constant 0 : index
    %c0_0 = arith.constant 0 : index
    %0 = vector.load %arg1[%c0, %c0_0] : memref<16x32xf32, #tpu.memory_space<vmem>>, vector<16x32xf32>
    %1 = arith.mulf %0, %0 : vector<16x32xf32>
    %cst = arith.constant dense<0.000000e+00> : vector<16xf32>
    %2 = vector.multi_reduction <add>, %1, %cst [1] : vector<16x32xf32> to vector<16xf32>
    %3 = vector.shape_cast %2 : vector<16xf32> to vector<16x1xf32>
    %4 = math.sqrt %3 : vector<16x1xf32>
    %cst_1 = arith.constant 0.176776692 : f32
    %5 = vector.broadcast %cst_1 : f32 to vector<16x1xf32>
    %6 = arith.mulf %4, %5 : vector<16x1xf32>
    %cst_2 = arith.constant 9.99999993E-9 : f32
    %7 = vector.broadcast %cst_2 : f32 to vector<16x1xf32>
    %8 = arith.addf %6, %7 : vector<16x1xf32>
    %9 = tpu.reciprocal %8 : vector<16x1xf32> -> vector<16x1xf32>
    %10 = vector.broadcast %9 : vector<16x1xf32> to vector<16x32xf32>
    %11 = arith.mulf %0, %10 : vector<16x32xf32>
    %c0_3 = arith.constant 0 : index
    %c0_4 = arith.constant 0 : index
    %12 = vector.load %arg2[%c0_3, %c0_4] : memref<1x32xf32, #tpu.memory_space<vmem>>, vector<1x32xf32>
    %13 = vector.broadcast %12 : vector<1x32xf32> to vector<16x32xf32>
    %14 = arith.mulf %11, %13 : vector<16x32xf32>
    %c0_5 = arith.constant 0 : index
    %c0_6 = arith.constant 0 : index
    %15 = vector.load %arg3[%c0_5, %c0_6] : memref<16x32xf32, #tpu.memory_space<vmem>>, vector<16x32xf32>
    tpu.vector_store %arg3[%c0_5, %c0_6], %14 {strides = array<i32>} : memref<16x32xf32, #tpu.memory_space<vmem>>, vector<16x32xf32>,
    return
  }
  func.func @transform_0(%arg0: i32) -> (i32, i32) {
    %c0_i32 = arith.constant 0 : i32
    %c0_i32_0 = arith.constant 0 : i32
    return %arg0, %c0_i32 : i32, i32
  }
  func.func @transform_1(%arg0: i32) -> (i32, i32) {
    %c0_i32 = arith.constant 0 : i32
    %c0_i32_0 = arith.constant 0 : i32
    %c0_i32_1 = arith.constant 0 : i32
    return %c0_i32, %c0_i32_0 : i32, i32
  }
  func.func @transform_2(%arg0: i32) -> (i32, i32) {
    %c0_i32 = arith.constant 0 : i32
    %c0_i32_0 = arith.constant 0 : i32
    return %arg0, %c0_i32 : i32, i32
  }
}

</mosaic_0001>

<llo_original>
// kernel: tpu_custom_call.1
$region0: #{tpu_custom_call.1}
  #allocation0 [shape = 'u32[]', space=smem, size = 0x4, offset = 0x4, fixed_abs, tag = 'smem constant byte address 0x4 - core index']
  #allocation1 [shape = 'u32[144,128]{1,0:T(1,128)}', space=vmem, size = 0x12000, scoped, tag = 'internal scratch']
  %s0 = inlined_call_operand.hbm [shape: f32[16,32], index: 0, kind: input, shape index: {}]
  %s1 = inlined_call_operand.vmem [shape: f32[1,32], index: 1, kind: input, shape index: {}]
  %s2 = inlined_call_operand.hbm [shape: f32[16,32], index: 2, kind: output, shape index: {}]
  %s3 = sld [smem:[#allocation0]]
  $region22: #{tpu_custom_call.1} parent=0
    _
  %s5 = ssub.s32 1, %s3
  %s6 = scalar_select 0, %s5, %s3
  $region1: #{tpu_custom_call.1} parent=0
    #allocation2 [shape = 'u8[8192]{0}', space=vmem, size = 0x2000, scoped, tag = 'input window, operand 0, single buffered']
    #allocation3 [shape = 's32[1]{0}', space=sflag, size = 0x4, scoped, tag = 'scoped memory for tpu_custom_call.1']
    #allocation4 [shape = 's32[1]{0}', space=sflag, size = 0x4, scoped, tag = 'scoped memory for tpu_custom_call.1']
    #allocation5 [shape = 'u8[8192]{0}', space=vmem, size = 0x2000, scoped, tag = 'output window, operand 0, single buffered']
    %7 = vsyncpa [#allocation3], 0
    %8 = vsyncpa [#allocation4], 0
    // Predicated region
    $region2: #{tpu_custom_call.1} parent=1 // pred_check
      _
    $region3: #{tpu_custom_call.1} parent=1 // pred_check_branch
      %10 = sbr.rel (0) target = $region5
    $region4: #{tpu_custom_call.1} parent=1 // pred_region
      %s12 = ssub.s32 256, 256
      %13 = vsyncadd [#allocation3], %s12
      %s14 = sshll.u32 [#allocation2], 4
      %s15 = int_to_ptr.vmem [resolvable:$true] %s14
      %20 = dma.hbm_to_vmem [thread:$0]  %s0, 256, %s15, [#allocation3], 128, 128, 8
    $region5: #{tpu_custom_call.1} parent=1 // pred_fallthru
      _
    // Predicated region
    $region6: #{tpu_custom_call.1} parent=1 // pred_check
      _
    $region7: #{tpu_custom_call.1} parent=1 // pred_check_branch
      %22 = sbr.rel (0) target = $region9
    $region8: #{tpu_custom_call.1} parent=1 // pred_region
      _
    $region9: #{tpu_custom_call.1} parent=1 // pred_fallthru
      _
    // Predicated region
    $region10: #{tpu_custom_call.1} parent=1 // pred_check
      _
    $region11: #{tpu_custom_call.1} parent=1 // pred_check_branch
      %24 = sbr.rel (0) target = $region13
    $region12: #{tpu_custom_call.1} parent=1 // pred_region
      %25 = dma.done [#allocation3], 256
    $region13: #{tpu_custom_call.1} parent=1 // pred_fallthru
      _
    %v26 = vld [vmem:[#allocation2] sm:$0xff]
    %v27 = vld [vmem:[#allocation2 + $0x8] sm:$0xff]
    %v28 = vmul.f32 %v26, %v26
    %v29 = vmul.f32 %v27, %v27
    %vm30 = vcmask 261120
    %v31 = vsel %vm30, %v28, 0.0
    %32 = vadd.xlane.f32.xlu0 %v31
    %v33 = vpop.xlane.xlu0 %32
    %v34 = vsel %vm30, %v29, 0.0
    %35 = vadd.xlane.f32.xlu0 %v34
    %v36 = vpop.xlane.xlu0 %35
    %v37 = vrsqrt.pop %v33
    %v38 = vmul.f32 %v33, %v37
    %vm39 = vcmp.eq.f32.partialorder %v33, inf
    %v40 = vsel %vm39, %v33, %v38
    %vm41 = vcmp.eq.f32.partialorder %v33, 0.0
    %v42 = vand.u32 %v33, 2147483648
    %v43 = vsel %vm41, %v42, %v40
    %v44 = vrsqrt.pop %v36
    %v45 = vmul.f32 %v36, %v44
    %vm46 = vcmp.eq.f32.partialorder %v36, inf
    %v47 = vsel %vm46, %v36, %v45
    %vm48 = vcmp.eq.f32.partialorder %v36, 0.0
    %v49 = vand.u32 %v36, 2147483648
    %v50 = vsel %vm48, %v49, %v47
    %v51 = vmul.f32 %v43, 0.17677669
    %v52 = vmul.f32 %v50, 0.17677669
    %v53 = vadd.f32 %v51, 1e-08
    %v54 = vadd.f32 %v52, 1e-08
    %v55 = vrcp.pop %v53
    %v56 = vrcp.pop %v54
    %v57 = vmul.f32 %v26, %v55
    %v58 = vmul.f32 %v27, %v56
    %v59 = vld [vmem:[%s1] sm:$0x1]
    %v61 = vlaneseq
    %v62 = vshrl.u32 %v61, 7
    %v63 = vsub.s32 0, %v62
    %v64 = vrot.slane %v59, %v63
    %v66 = vmul.f32 %v57, %v64
    %v67 = vmul.f32 %v58, %v64
    %68 = vst.msk [vmem:[#allocation5] sm:$0xff] %vm30, %v66
    %69 = vst.msk [vmem:[#allocation5 + $0x8] sm:$0xff] %vm30, %v67
    // Predicated region
    $region14: #{tpu_custom_call.1} parent=1 // pred_check
      _
    $region15: #{tpu_custom_call.1} parent=1 // pred_check_branch
      %71 = sbr.rel (0) target = $region17
    $region16: #{tpu_custom_call.1} parent=1 // pred_region
      %s73 = ssub.s32 256, 256
      %74 = vsyncadd [#allocation4], %s73
      %s75 = sshll.u32 [#allocation5], 4
      %s76 = int_to_ptr.vmem [resolvable:$true] %s75
      %81 = dma.vmem_to_hbm [thread:$0]  %s76, 256, %s2, [#allocation4], 128, 128, 8
    $region17: #{tpu_custom_call.1} parent=1 // pred_fallthru
      _
    // Predicated region
    $region18: #{tpu_custom_call.1} parent=1 // pred_check
      _
    $region19: #{tpu_custom_call.1} parent=1 // pred_check_branch
      %83 = sbr.rel (0) target = $region21
    $region20: #{tpu_custom_call.1} parent=1 // pred_region
      %84 = dma.done [#allocation4], 256
    $region21: #{tpu_custom_call.1} parent=1 // pred_fallthru
      _
    %85 = vsyncpa [#allocation3], 1
    %86 = vsyncpa [#allocation4], 1

</llo_original>
